<compile_context>
chip_gen: v7x
topology: tpu7x:2x2x1
jax: 0.10.0
libtpu: 0.0.40
codegen_flags: <defaults>
</compile_context>

<pallas_src>
import functools

import jax
import jax.numpy as jnp
from jax import lax
from jax.experimental import pallas as pl
from jax.experimental.pallas import tpu as pltpu


def _shift_lanes(v, off, nl):
    """result[:, q] = v[:, (q + off) % nl] for a static off (jnp.roll(-off) equivalent)."""
    if off == 0:
        return v
    o = off % nl
    return jnp.concatenate([v[:, o:], v[:, :o]], axis=1)


def resblock_kernel(x_ref, w1_ref, b1_ref, w2_ref, b2_ref, o_ref, *, Hp, Wp, NL):
    f32 = jnp.float32
    # Load everything exactly once (values, not repeated unaligned ref slices).
    xin = x_ref[...].astype(f32)     # (BC, NL)   lane q == padded-flat position q
    w1 = w1_ref[...].astype(f32)     # (BC, 9*BC) tap-fused, batch-block-diagonal
    w2 = w2_ref[...].astype(f32)     # (BC, 9*BC)
    b1 = b1_ref[...].astype(f32)     # (BC, 1)
    b2 = b2_ref[...].astype(f32)     # (BC, 1)

    # Interior mask generated in-kernel (no extra input stream).  Row/col of the
    # flattened index are recovered with exact float arithmetic (avoids vector
    # integer div/mod): (q+0.5)/Wp is never near an integer, so floor is exact.
    q = lax.broadcasted_iota(jnp.int32, (1, NL), 1).astype(f32)
    row = jnp.floor((q + 0.5) * (1.0 / Wp))
    col = q - row * Wp
    interior = (row >= 1) & (row <= Hp - 2) & (col >= 1) & (col <= Wp - 2)
    mask = interior.astype(f32)      # (1, NL): 1 on interior pixels, 0 elsewhere

    # 3x3 tap offsets in flattened padded coordinates.
    offs = [(ky - 1) * Wp + (kx - 1) for ky in range(3) for kx in range(3)]

    # ---- conv1: one fused MXU matmul (BC, 9*BC) @ (9*BC, NL) ----
    x9 = jnp.concatenate([_shift_lanes(xin, o, NL) for o in offs], axis=0)
    y1 = jnp.dot(w1, x9, preferred_element_type=f32)
    # bias + ReLU, then zero the border so conv2 sees torch's zero-padded intermediate.
    y1 = jnp.maximum(y1 + b1, 0.0) * mask

    # ---- conv2: one fused MXU matmul on the masked intermediate ----
    y9 = jnp.concatenate([_shift_lanes(y1, o, NL) for o in offs], axis=0)
    y2 = jnp.dot(w2, y9, preferred_element_type=f32)

    # Residual add + ReLU; full-width lane-dense store (NL is a multiple of 128).
    o_ref[...] = jnp.maximum(xin + y2 + b2, 0.0).astype(o_ref.dtype)


def resblock_forward(x, w1, b1, w2, b2):
    """x: (B, C, H, W) NCHW; w*: (C, C, 3, 3) OIHW; b*: (C,). Returns NCHW."""
    B, C, H, W = x.shape
    Hp, Wp = H + 2, W + 2
    Np = Hp * Wp
    BC = B * C
    NL = ((Np + 127) // 128) * 128                 # lane-dense working width (384 here)
    extra_rows = pl.cdiv(NL - Np, Wp) if NL > Np else 0

    # Single pad: conv zero halo (1 px) plus enough extra zero rows at the bottom that
    # the flattened image covers NL lanes.  The reshape to (B*C, flat) is free.
    xp = jnp.pad(x, ((0, 0), (0, 0), (1, 1 + extra_rows), (1, 1)))
    x_flat = xp.reshape(BC, (Hp + extra_rows) * Wp)       # (BC, >= NL)

    # Tap-fused, batch-block-diagonal weights: row = b*C+co, col = tap*(B*C)+b*C+ci.
    def tap_block_diag(w):
        taps = jnp.transpose(w, (2, 3, 0, 1)).reshape(9, C, C)      # (tap, Cout, Cin)
        blk = jnp.einsum('ab,tij->aitbj', jnp.eye(B, dtype=w.dtype), taps)
        return blk.reshape(BC, 9 * BC)

    w1bd, w2bd = tap_block_diag(w1), tap_block_diag(w2)
    b1bd = jnp.tile(b1, B).reshape(BC, 1)
    b2bd = jnp.tile(b2, B).reshape(BC, 1)

    kern = functools.partial(resblock_kernel, Hp=Hp, Wp=Wp, NL=NL)
    out_flat = pl.pallas_call(
        kern,
        out_shape=jax.ShapeDtypeStruct((BC, NL), x.dtype),
        grid=(1,),                                  # single step: work is tiny, avoid
        in_specs=[                                  # per-grid-step overhead on 1-TC chips
            pl.BlockSpec((BC, NL), lambda i: (0, 0)),        # first NL lanes of x_flat
            pl.BlockSpec((BC, 9 * BC), lambda i: (0, 0)),
            pl.BlockSpec((BC, 1), lambda i: (0, 0)),
            pl.BlockSpec((BC, 9 * BC), lambda i: (0, 0)),
            pl.BlockSpec((BC, 1), lambda i: (0, 0)),
        ],
        out_specs=pl.BlockSpec((BC, NL), lambda i: (0, 0)),
        compiler_params=pltpu.CompilerParams(
            dimension_semantics=("arbitrary",),
            vmem_limit_bytes=32 * 1024 * 1024,
        ),
    )(x_flat, w1bd, b1bd, w2bd, b2bd)
    # TODO(synk): for large B*C or H*W, add grid axes (batch/channel blocks and an
    # H-tile with a 1-row halo) so per-step VMEM stays within v7x's 64 MiB budget.

    # Lane q -> padded pixel (q // Wp, q % Wp); drop the 1-px halo (free reshapes + slice).
    out = out_flat.reshape(B, C, NL)[:, :, :Np]
    return out.reshape(B, C, Hp, Wp)[:, :, 1:H + 1, 1:W + 1]


def resblock_ref(x_nchw, w1, b1, w2, b2):
    """Pure-JAX reference matching torch semantics (NCHW / OIHW)."""
    dn = ('NCHW', 'OIHW', 'NCHW')
    y = jax.lax.conv_general_dilated(x_nchw, w1, (1, 1), ((1, 1), (1, 1)),
                                     dimension_numbers=dn)
    y = jnp.maximum(y + b1.reshape(1, -1, 1, 1), 0.0)
    y = jax.lax.conv_general_dilated(y, w2, (1, 1), ((1, 1), (1, 1)),
                                     dimension_numbers=dn)
    y = y + b2.reshape(1, -1, 1, 1)
    return jnp.maximum(x_nchw + y, 0.0)


if __name__ == "__main__":
    B, C, H, W = 2, 4, 16, 16
    key = jax.random.PRNGKey(0)
    kx, kw1, kb1, kw2, kb2 = jax.random.split(key, 5)

    # PyTorch-like init: uniform(-1/sqrt(fan_in), 1/sqrt(fan_in))
    fan_in = C * 3 * 3
    bound = 1.0 / (fan_in ** 0.5)
    x = jax.random.normal(kx, (B, C, H, W), jnp.float32)
    w1 = jax.random.uniform(kw1, (C, C, 3, 3), jnp.float32, -bound, bound)
    b1 = jax.random.uniform(kb1, (C,), jnp.float32, -bound, bound)
    w2 = jax.random.uniform(kw2, (C, C, 3, 3), jnp.float32, -bound, bound)
    b2 = jax.random.uniform(kb2, (C,), jnp.float32, -bound, bound)

    out = jax.block_until_ready(resblock_forward(x, w1, b1, w2, b2))
    ref = jax.block_until_ready(resblock_ref(x, w1, b1, w2, b2))

    assert out.shape == (B, C, H, W), out.shape
    # Both paths feed the same f32 operands to the MXU at default precision, so they
    # agree far below this tolerance (bf16-pass rounding is shared, accumulation is f32).
    max_err = float(jnp.max(jnp.abs(out - ref)))
    assert max_err < 2e-3, max_err
    print("KERNEL_OK")
</pallas_src>

<mosaic_0001>
module attributes {stable_mosaic.version = 11 : i64} {
  func.func @resblock_kernel(%arg0: i32, %arg1: memref<8x384xf32, #tpu.memory_space<vmem>>, %arg2: memref<8x72xf32, #tpu.memory_space<vmem>>, %arg3: memref<8x1xf32, #tpu.memory_space<vmem>>, %arg4: memref<8x72xf32, #tpu.memory_space<vmem>>, %arg5: memref<8x1xf32, #tpu.memory_space<vmem>>, %arg6: memref<8x384xf32, #tpu.memory_space<vmem>>) attributes {dimension_semantics = [#tpu.dimension_semantics<arbitrary>], iteration_bounds = array<i64: 1>, scalar_prefetch = 0 : i64, scratch_operands = 0 : i64, tpu.core_type = #tpu.core_type<tc>, window_params = [{transform_indices = @transform_0, window_bounds = array<i64: 8, 384>}, {pipeline_mode = #tpu.pipeline_mode<synchronous>, transform_indices = @transform_1, window_bounds = array<i64: 8, 72>}, {pipeline_mode = #tpu.pipeline_mode<synchronous>, transform_indices = @transform_2, window_bounds = array<i64: 8, 1>}, {pipeline_mode = #tpu.pipeline_mode<synchronous>, transform_indices = @transform_3, window_bounds = array<i64: 8, 72>}, {pipeline_mode = #tpu.pipeline_mode<synchronous>, transform_indices = @transform_4, window_bounds = array<i64: 8, 1>}, {pipeline_mode = #tpu.pipeline_mode<synchronous>, transform_indices = @transform_5, window_bounds = array<i64: 8, 384>}]} {
    %c0 = arith.constant 0 : index
    %c0_0 = arith.constant 0 : index
    %0 = vector.load %arg1[%c0, %c0_0] : memref<8x384xf32, #tpu.memory_space<vmem>>, vector<8x384xf32>
    %c0_1 = arith.constant 0 : index
    %c0_2 = arith.constant 0 : index
    %1 = vector.load %arg2[%c0_1, %c0_2] : memref<8x72xf32, #tpu.memory_space<vmem>>, vector<8x72xf32>
    %c0_3 = arith.constant 0 : index
    %c0_4 = arith.constant 0 : index
    %2 = vector.load %arg4[%c0_3, %c0_4] : memref<8x72xf32, #tpu.memory_space<vmem>>, vector<8x72xf32>
    %c0_5 = arith.constant 0 : index
    %c0_6 = arith.constant 0 : index
    %3 = vector.load %arg3[%c0_5, %c0_6] : memref<8x1xf32, #tpu.memory_space<vmem>>, vector<8x1xf32>
    %c0_7 = arith.constant 0 : index
    %c0_8 = arith.constant 0 : index
    %4 = vector.load %arg5[%c0_7, %c0_8] : memref<8x1xf32, #tpu.memory_space<vmem>>, vector<8x1xf32>
    %5 = tpu.iota {dimensions = array<i32: 1>} : vector<1x384xi32>
    %6 = arith.sitofp %5 : vector<1x384xi32> to vector<1x384xf32>
    %cst = arith.constant 5.000000e-01 : f32
    %7 = vector.broadcast %cst : f32 to vector<1x384xf32>
    %8 = arith.addf %6, %7 : vector<1x384xf32>
    %cst_9 = arith.constant 0.055555556 : f32
    %9 = vector.broadcast %cst_9 : f32 to vector<1x384xf32>
    %10 = arith.mulf %8, %9 : vector<1x384xf32>
    %11 = math.floor %10 : vector<1x384xf32>
    %cst_10 = arith.constant 1.800000e+01 : f32
    %12 = vector.broadcast %cst_10 : f32 to vector<1x384xf32>
    %13 = arith.mulf %11, %12 : vector<1x384xf32>
    %14 = arith.subf %6, %13 : vector<1x384xf32>
    %cst_11 = arith.constant 1.000000e+00 : f32
    %15 = vector.broadcast %cst_11 : f32 to vector<1x384xf32>
    %16 = arith.cmpf oge, %11, %15 : vector<1x384xf32>
    %cst_12 = arith.constant 1.600000e+01 : f32
    %17 = vector.broadcast %cst_12 : f32 to vector<1x384xf32>
    %18 = arith.cmpf ole, %11, %17 : vector<1x384xf32>
    %19 = arith.andi %16, %18 : vector<1x384xi1>
    %cst_13 = arith.constant 1.000000e+00 : f32
    %20 = vector.broadcast %cst_13 : f32 to vector<1x384xf32>
    %21 = arith.cmpf oge, %14, %20 : vector<1x384xf32>
    %22 = arith.andi %19, %21 : vector<1x384xi1>
    %cst_14 = arith.constant 1.600000e+01 : f32
    %23 = vector.broadcast %cst_14 : f32 to vector<1x384xf32>
    %24 = arith.cmpf ole, %14, %23 : vector<1x384xf32>
    %25 = arith.andi %22, %24 : vector<1x384xi1>
    %26 = arith.extui %25 : vector<1x384xi1> to vector<1x384xi32>
    %27 = arith.sitofp %26 : vector<1x384xi32> to vector<1x384xf32>
    %28 = vector.extract_strided_slice %0 {offsets = [0, 365], sizes = [8, 19], strides = [1, 1]} : vector<8x384xf32> to vector<8x19xf32>
    %29 = vector.extract_strided_slice %0 {offsets = [0, 0], sizes = [8, 365], strides = [1, 1]} : vector<8x384xf32> to vector<8x365xf32>
    %30 = tpu.concatenate %28, %29 in 1 : vector<8x19xf32>, vector<8x365xf32> -> vector<8x384xf32>
    %31 = vector.extract_strided_slice %0 {offsets = [0, 366], sizes = [8, 18], strides = [1, 1]} : vector<8x384xf32> to vector<8x18xf32>
    %32 = vector.extract_strided_slice %0 {offsets = [0, 0], sizes = [8, 366], strides = [1, 1]} : vector<8x384xf32> to vector<8x366xf32>
    %33 = tpu.concatenate %31, %32 in 1 : vector<8x18xf32>, vector<8x366xf32> -> vector<8x384xf32>
    %34 = vector.extract_strided_slice %0 {offsets = [0, 367], sizes = [8, 17], strides = [1, 1]} : vector<8x384xf32> to vector<8x17xf32>
    %35 = vector.extract_strided_slice %0 {offsets = [0, 0], sizes = [8, 367], strides = [1, 1]} : vector<8x384xf32> to vector<8x367xf32>
    %36 = tpu.concatenate %34, %35 in 1 : vector<8x17xf32>, vector<8x367xf32> -> vector<8x384xf32>
    %37 = vector.extract_strided_slice %0 {offsets = [0, 383], sizes = [8, 1], strides = [1, 1]} : vector<8x384xf32> to vector<8x1xf32>
    %38 = vector.extract_strided_slice %0 {offsets = [0, 0], sizes = [8, 383], strides = [1, 1]} : vector<8x384xf32> to vector<8x383xf32>
    %39 = tpu.concatenate %37, %38 in 1 : vector<8x1xf32>, vector<8x383xf32> -> vector<8x384xf32>
    %40 = vector.extract_strided_slice %0 {offsets = [0, 1], sizes = [8, 383], strides = [1, 1]} : vector<8x384xf32> to vector<8x383xf32>
    %41 = vector.extract_strided_slice %0 {offsets = [0, 0], sizes = [8, 1], strides = [1, 1]} : vector<8x384xf32> to vector<8x1xf32>
    %42 = tpu.concatenate %40, %41 in 1 : vector<8x383xf32>, vector<8x1xf32> -> vector<8x384xf32>
    %43 = vector.extract_strided_slice %0 {offsets = [0, 17], sizes = [8, 367], strides = [1, 1]} : vector<8x384xf32> to vector<8x367xf32>
    %44 = vector.extract_strided_slice %0 {offsets = [0, 0], sizes = [8, 17], strides = [1, 1]} : vector<8x384xf32> to vector<8x17xf32>
    %45 = tpu.concatenate %43, %44 in 1 : vector<8x367xf32>, vector<8x17xf32> -> vector<8x384xf32>
    %46 = vector.extract_strided_slice %0 {offsets = [0, 18], sizes = [8, 366], strides = [1, 1]} : vector<8x384xf32> to vector<8x366xf32>
    %47 = vector.extract_strided_slice %0 {offsets = [0, 0], sizes = [8, 18], strides = [1, 1]} : vector<8x384xf32> to vector<8x18xf32>
    %48 = tpu.concatenate %46, %47 in 1 : vector<8x366xf32>, vector<8x18xf32> -> vector<8x384xf32>
    %49 = vector.extract_strided_slice %0 {offsets = [0, 19], sizes = [8, 365], strides = [1, 1]} : vector<8x384xf32> to vector<8x365xf32>
    %50 = vector.extract_strided_slice %0 {offsets = [0, 0], sizes = [8, 19], strides = [1, 1]} : vector<8x384xf32> to vector<8x19xf32>
    %51 = tpu.concatenate %49, %50 in 1 : vector<8x365xf32>, vector<8x19xf32> -> vector<8x384xf32>
    %52 = tpu.concatenate %30, %33, %36, %39, %0, %42, %45, %48, %51 in 0 : vector<8x384xf32>, vector<8x384xf32>, vector<8x384xf32>, vector<8x384xf32>, vector<8x384xf32>, vector<8x384xf32>, vector<8x384xf32>, vector<8x384xf32>, vector<8x384xf32> -> vector<72x384xf32>
    %cst_15 = arith.constant dense<0.000000e+00> : vector<8x384xf32>
    %53 = tpu.matmul %1, %52, %cst_15 {dimension_numbers = #tpu.dot_dimension_numbers<[1], [0], [0], [1], [0, 0, 1, 1], [], []>} : vector<8x72xf32>, vector<72x384xf32>, vector<8x384xf32> -> vector<8x384xf32>
    %54 = vector.broadcast %3 : vector<8x1xf32> to vector<8x384xf32>
    %55 = arith.addf %53, %54 : vector<8x384xf32>
    %cst_16 = arith.constant 0.000000e+00 : f32
    %56 = vector.broadcast %cst_16 : f32 to vector<8x384xf32>
    %57 = arith.maximumf %55, %56 : vector<8x384xf32>
    %58 = vector.broadcast %27 : vector<1x384xf32> to vector<8x384xf32>
    %59 = arith.mulf %57, %58 : vector<8x384xf32>
    %60 = vector.extract_strided_slice %59 {offsets = [0, 365], sizes = [8, 19], strides = [1, 1]} : vector<8x384xf32> to vector<8x19xf32>
    %61 = vector.extract_strided_slice %59 {offsets = [0, 0], sizes = [8, 365], strides = [1, 1]} : vector<8x384xf32> to vector<8x365xf32>
    %62 = tpu.concatenate %60, %61 in 1 : vector<8x19xf32>, vector<8x365xf32> -> vector<8x384xf32>
    %63 = vector.extract_strided_slice %59 {offsets = [0, 366], sizes = [8, 18], strides = [1, 1]} : vector<8x384xf32> to vector<8x18xf32>
    %64 = vector.extract_strided_slice %59 {offsets = [0, 0], sizes = [8, 366], strides = [1, 1]} : vector<8x384xf32> to vector<8x366xf32>
    %65 = tpu.concatenate %63, %64 in 1 : vector<8x18xf32>, vector<8x366xf32> -> vector<8x384xf32>
    %66 = vector.extract_strided_slice %59 {offsets = [0, 367], sizes = [8, 17], strides = [1, 1]} : vector<8x384xf32> to vector<8x17xf32>
    %67 = vector.extract_strided_slice %59 {offsets = [0, 0], sizes = [8, 367], strides = [1, 1]} : vector<8x384xf32> to vector<8x367xf32>
    %68 = tpu.concatenate %66, %67 in 1 : vector<8x17xf32>, vector<8x367xf32> -> vector<8x384xf32>
    %69 = vector.extract_strided_slice %59 {offsets = [0, 383], sizes = [8, 1], strides = [1, 1]} : vector<8x384xf32> to vector<8x1xf32>
    %70 = vector.extract_strided_slice %59 {offsets = [0, 0], sizes = [8, 383], strides = [1, 1]} : vector<8x384xf32> to vector<8x383xf32>
    %71 = tpu.concatenate %69, %70 in 1 : vector<8x1xf32>, vector<8x383xf32> -> vector<8x384xf32>
    %72 = vector.extract_strided_slice %59 {offsets = [0, 1], sizes = [8, 383], strides = [1, 1]} : vector<8x384xf32> to vector<8x383xf32>
    %73 = vector.extract_strided_slice %59 {offsets = [0, 0], sizes = [8, 1], strides = [1, 1]} : vector<8x384xf32> to vector<8x1xf32>
    %74 = tpu.concatenate %72, %73 in 1 : vector<8x383xf32>, vector<8x1xf32> -> vector<8x384xf32>
    %75 = vector.extract_strided_slice %59 {offsets = [0, 17], sizes = [8, 367], strides = [1, 1]} : vector<8x384xf32> to vector<8x367xf32>
    %76 = vector.extract_strided_slice %59 {offsets = [0, 0], sizes = [8, 17], strides = [1, 1]} : vector<8x384xf32> to vector<8x17xf32>
    %77 = tpu.concatenate %75, %76 in 1 : vector<8x367xf32>, vector<8x17xf32> -> vector<8x384xf32>
    %78 = vector.extract_strided_slice %59 {offsets = [0, 18], sizes = [8, 366], strides = [1, 1]} : vector<8x384xf32> to vector<8x366xf32>
    %79 = vector.extract_strided_slice %59 {offsets = [0, 0], sizes = [8, 18], strides = [1, 1]} : vector<8x384xf32> to vector<8x18xf32>
    %80 = tpu.concatenate %78, %79 in 1 : vector<8x366xf32>, vector<8x18xf32> -> vector<8x384xf32>
    %81 = vector.extract_strided_slice %59 {offsets = [0, 19], sizes = [8, 365], strides = [1, 1]} : vector<8x384xf32> to vector<8x365xf32>
    %82 = vector.extract_strided_slice %59 {offsets = [0, 0], sizes = [8, 19], strides = [1, 1]} : vector<8x384xf32> to vector<8x19xf32>
    %83 = tpu.concatenate %81, %82 in 1 : vector<8x365xf32>, vector<8x19xf32> -> vector<8x384xf32>
    %84 = tpu.concatenate %62, %65, %68, %71, %59, %74, %77, %80, %83 in 0 : vector<8x384xf32>, vector<8x384xf32>, vector<8x384xf32>, vector<8x384xf32>, vector<8x384xf32>, vector<8x384xf32>, vector<8x384xf32>, vector<8x384xf32>, vector<8x384xf32> -> vector<72x384xf32>
    %cst_17 = arith.constant dense<0.000000e+00> : vector<8x384xf32>
    %85 = tpu.matmul %2, %84, %cst_17 {dimension_numbers = #tpu.dot_dimension_numbers<[1], [0], [0], [1], [0, 0, 1, 1], [], []>} : vector<8x72xf32>, vector<72x384xf32>, vector<8x384xf32> -> vector<8x384xf32>
    %86 = arith.addf %0, %85 : vector<8x384xf32>
    %87 = vector.broadcast %4 : vector<8x1xf32> to vector<8x384xf32>
    %88 = arith.addf %86, %87 : vector<8x384xf32>
    %cst_18 = arith.constant 0.000000e+00 : f32
    %89 = vector.broadcast %cst_18 : f32 to vector<8x384xf32>
    %90 = arith.maximumf %88, %89 : vector<8x384xf32>
    %c0_19 = arith.constant 0 : index
    %c0_20 = arith.constant 0 : index
    %91 = vector.load %arg6[%c0_19, %c0_20] : memref<8x384xf32, #tpu.memory_space<vmem>>, vector<8x384xf32>
    tpu.vector_store %arg6[%c0_19, %c0_20], %90 {strides = array<i32>} : memref<8x384xf32, #tpu.memory_space<vmem>>, vector<8x384xf32>,
    return
  }
  func.func @transform_0(%arg0: i32) -> (i32, i32) {
    %c0_i32 = arith.constant 0 : i32
    %c0_i32_0 = arith.constant 0 : i32
    %c0_i32_1 = arith.constant 0 : i32
    return %c0_i32, %c0_i32_0 : i32, i32
  }
  func.func @transform_1(%arg0: i32) -> (i32, i32) {
    %c0_i32 = arith.constant 0 : i32
    %c0_i32_0 = arith.constant 0 : i32
    %c0_i32_1 = arith.constant 0 : i32
    return %c0_i32, %c0_i32_0 : i32, i32
  }
  func.func @transform_2(%arg0: i32) -> (i32, i32) {
    %c0_i32 = arith.constant 0 : i32
    %c0_i32_0 = arith.constant 0 : i32
    %c0_i32_1 = arith.constant 0 : i32
    return %c0_i32, %c0_i32_0 : i32, i32
  }
  func.func @transform_3(%arg0: i32) -> (i32, i32) {
    %c0_i32 = arith.constant 0 : i32
    %c0_i32_0 = arith.constant 0 : i32
    %c0_i32_1 = arith.constant 0 : i32
    return %c0_i32, %c0_i32_0 : i32, i32
  }
  func.func @transform_4(%arg0: i32) -> (i32, i32) {
    %c0_i32 = arith.constant 0 : i32
    %c0_i32_0 = arith.constant 0 : i32
    %c0_i32_1 = arith.constant 0 : i32
    return %c0_i32, %c0_i32_0 : i32, i32
  }
  func.func @transform_5(%arg0: i32) -> (i32, i32) {
    %c0_i32 = arith.constant 0 : i32
    %c0_i32_0 = arith.constant 0 : i32
    %c0_i32_1 = arith.constant 0 : i32
    return %c0_i32, %c0_i32_0 : i32, i32
  }
}

</mosaic_0001>

<llo_original>
// kernel: tpu_custom_call.1
$region0: #{tpu_custom_call.1}
  #allocation0 [shape = 'u32[]', space=smem, size = 0x4, offset = 0x4, fixed_abs, tag = 'smem constant byte address 0x4 - core index']
  #allocation1 [shape = 'u32[144,128]{1,0:T(1,128)}', space=vmem, size = 0x12000, scoped, tag = 'internal scratch']
  %s0 = inlined_call_operand.hbm [shape: f32[8,396], index: 0, kind: input, shape index: {}]
  %s1 = inlined_call_operand.vmem [shape: f32[8,72], index: 1, kind: input, shape index: {}]
  %s2 = inlined_call_operand.vmem [shape: f32[8,1], index: 2, kind: input, shape index: {}]
  %s3 = inlined_call_operand.vmem [shape: f32[8,72], index: 3, kind: input, shape index: {}]
  %s4 = inlined_call_operand.vmem [shape: f32[8,1], index: 4, kind: input, shape index: {}]
  %s5 = inlined_call_operand.hbm [shape: f32[8,384], index: 5, kind: output, shape index: {}]
  %s6 = sld [smem:[#allocation0]]
  $region34: #{tpu_custom_call.1} parent=0
    _
  %s8 = ssub.s32 1, %s6
  %s9 = scalar_select 0, %s8, %s6
  $region1: #{tpu_custom_call.1} parent=0
    #allocation2 [shape = 'u8[12288]{0}', space=vmem, size = 0x3000, scoped, tag = 'input window, operand 0, single buffered']
    #allocation3 [shape = 's32[1]{0}', space=sflag, size = 0x4, scoped, tag = 'scoped memory for tpu_custom_call.1']
    #allocation4 [shape = 's32[1]{0}', space=sflag, size = 0x4, scoped, tag = 'scoped memory for tpu_custom_call.1']
    #allocation5 [shape = 'u8[12288]{0}', space=vmem, size = 0x3000, scoped, tag = 'output window, operand 0, single buffered']
    %10 = vsyncpa [#allocation3], 0
    %11 = vsyncpa [#allocation4], 0
    // Predicated region
    $region2: #{tpu_custom_call.1} parent=1 // pred_check
      _
    $region3: #{tpu_custom_call.1} parent=1 // pred_check_branch
      %13 = sbr.rel (0) target = $region5
    $region4: #{tpu_custom_call.1} parent=1 // pred_region
      %s15 = ssub.s32 384, 384
      %16 = vsyncadd [#allocation3], %s15
      %s18 = sshll.u32 [#allocation2], 4
      %s19 = int_to_ptr.vmem [resolvable:$true] %s18
      %21 = dma.hbm_to_vmem [thread:$0]  %s0, 384, %s19, [#allocation3]
    $region5: #{tpu_custom_call.1} parent=1 // pred_fallthru
      _
    // Predicated region
    $region6: #{tpu_custom_call.1} parent=1 // pred_check
      _
    $region7: #{tpu_custom_call.1} parent=1 // pred_check_branch
      %23 = sbr.rel (0) target = $region9
    $region8: #{tpu_custom_call.1} parent=1 // pred_region
      _
    $region9: #{tpu_custom_call.1} parent=1 // pred_fallthru
      _
    // Predicated region
    $region10: #{tpu_custom_call.1} parent=1 // pred_check
      _
    $region11: #{tpu_custom_call.1} parent=1 // pred_check_branch
      %25 = sbr.rel (0) target = $region13
    $region12: #{tpu_custom_call.1} parent=1 // pred_region
      _
    $region13: #{tpu_custom_call.1} parent=1 // pred_fallthru
      _
    // Predicated region
    $region14: #{tpu_custom_call.1} parent=1 // pred_check
      _
    $region15: #{tpu_custom_call.1} parent=1 // pred_check_branch
      %27 = sbr.rel (0) target = $region17
    $region16: #{tpu_custom_call.1} parent=1 // pred_region
      _
    $region17: #{tpu_custom_call.1} parent=1 // pred_fallthru
      _
    // Predicated region
    $region18: #{tpu_custom_call.1} parent=1 // pred_check
      _
    $region19: #{tpu_custom_call.1} parent=1 // pred_check_branch
      %29 = sbr.rel (0) target = $region21
    $region20: #{tpu_custom_call.1} parent=1 // pred_region
      _
    $region21: #{tpu_custom_call.1} parent=1 // pred_fallthru
      _
    // Predicated region
    $region22: #{tpu_custom_call.1} parent=1 // pred_check
      _
    $region23: #{tpu_custom_call.1} parent=1 // pred_check_branch
      %31 = sbr.rel (0) target = $region25
    $region24: #{tpu_custom_call.1} parent=1 // pred_region
      %32 = dma.done [#allocation3], 384
    $region25: #{tpu_custom_call.1} parent=1 // pred_fallthru
      _
    %v33 = vld [vmem:[#allocation2] sm:$0xff]
    %v34 = vld [vmem:[#allocation2 + $0x8] sm:$0xff]
    %v35 = vld [vmem:[#allocation2 + $0x10] sm:$0xff]
    %v36 = vld [vmem:[%s1] sm:$0xff]
    %v37 = vld [vmem:[%s3] sm:$0xff]
    %v38 = vld [vmem:[%s2] sm:$0xff]
    %v39 = vld [vmem:[%s4] sm:$0xff]
    %v40 = vlaneseq
    %v41 = vand.u32 %v40, 127
    %v42 = vadd.s32 %v41, 128
    %v43 = vadd.s32 %v41, 256
    %v44 = vcvt.s32.f32 %v41
    %v45 = vcvt.s32.f32 %v42
    %v46 = vcvt.s32.f32 %v43
    %v47 = vadd.f32 %v44, 0.5
    %v48 = vadd.f32 %v45, 0.5
    %v49 = vadd.f32 %v46, 0.5
    %v50 = vmul.f32 %v47, 0.055555556
    %v51 = vmul.f32 %v48, 0.055555556
    %v52 = vmul.f32 %v49, 0.055555556
    %v53 = vfloor.f32 %v50
    %v54 = vfloor.f32 %v51
    %v55 = vfloor.f32 %v52
    %v56 = vmul.f32 %v53, 18.0
    %v57 = vmul.f32 %v54, 18.0
    %v58 = vmul.f32 %v55, 18.0
    %v59 = vsub.f32 %v44, %v56
    %v60 = vsub.f32 %v45, %v57
    %v61 = vsub.f32 %v46, %v58
    %vm62 = vcmp.ge.f32.partialorder %v53, 1.0
    %vm63 = vcmp.ge.f32.partialorder %v54, 1.0
    %vm64 = vcmp.ge.f32.partialorder %v55, 1.0
    %vm65 = vcmp.le.f32.partialorder %v53, 16.0
    %vm66 = vcmp.le.f32.partialorder %v54, 16.0
    %vm67 = vcmp.le.f32.partialorder %v55, 16.0
    %vm68 = vmand %vm62, %vm65
    %vm69 = vmand %vm63, %vm66
    %vm70 = vmand %vm64, %vm67
    %vm71 = vcmp.ge.f32.partialorder %v59, 1.0
    %vm72 = vcmp.ge.f32.partialorder %v60, 1.0
    %vm73 = vcmp.ge.f32.partialorder %v61, 1.0
    %vm74 = vmand %vm68, %vm71
    %vm75 = vmand %vm69, %vm72
    %vm76 = vmand %vm70, %vm73
    %vm77 = vcmp.le.f32.partialorder %v59, 16.0
    %vm78 = vcmp.le.f32.partialorder %v60, 16.0
    %vm79 = vcmp.le.f32.partialorder %v61, 16.0
    %vm80 = vmand %vm74, %vm77
    %vm81 = vmand %vm75, %vm78
    %vm82 = vmand %vm76, %vm79
    %v83 = vsel %vm80, 1, 0
    %v84 = vsel %vm81, 1, 0
    %v85 = vsel %vm82, 1, 0
    %v86 = vcvt.s32.f32 %v83
    %v87 = vcvt.s32.f32 %v84
    %v88 = vcvt.s32.f32 %v85
    %90 = vrot.lane.b32.xlu0 %v35, 19
    %v91 = vpop.permute.xlu0 %90
    %95 = vrot.lane.b32.xlu0 %v33, 19
    %v96 = vpop.permute.xlu0 %95
    %97 = vrot.lane.b32.xlu0 %v34, 19
    %v98 = vpop.permute.xlu0 %97
    %vm99 = vcmask 154624
    %v100 = vsel %vm99, %v96, %v98
    %v101 = vsel %vm99, %v98, %v91
    %v105 = vsel %vm99, %v91, %v96
    %106 = vrot.lane.b32.xlu0 %v35, 18
    %v107 = vpop.permute.xlu0 %106
    %109 = vrot.lane.b32.xlu0 %v33, 18
    %v110 = vpop.permute.xlu0 %109
    %111 = vrot.lane.b32.xlu0 %v34, 18
    %v112 = vpop.permute.xlu0 %111
    %vm113 = vcmask 146432
    %v114 = vsel %vm113, %v110, %v112
    %v115 = vsel %vm113, %v112, %v107
    %v119 = vsel %vm113, %v107, %v110
    %120 = vrot.lane.b32.xlu0 %v35, 17
    %v121 = vpop.permute.xlu0 %120
    %123 = vrot.lane.b32.xlu0 %v33, 17
    %v124 = vpop.permute.xlu0 %123
    %125 = vrot.lane.b32.xlu0 %v34, 17
    %v126 = vpop.permute.xlu0 %125
    %vm127 = vcmask 138240
    %v128 = vsel %vm127, %v124, %v126
    %v129 = vsel %vm127, %v126, %v121
    %v133 = vsel %vm127, %v121, %v124
    %134 = vrot.lane.b32.xlu0 %v35, 1
    %v135 = vpop.permute.xlu0 %134
    %137 = vrot.lane.b32.xlu0 %v33, 1
    %v138 = vpop.permute.xlu0 %137
    %139 = vrot.lane.b32.xlu0 %v34, 1
    %v140 = vpop.permute.xlu0 %139
    %vm141 = vcmask 7168
    %v142 = vsel %vm141, %v138, %v140
    %v143 = vsel %vm141, %v140, %v135
    %v147 = vsel %vm141, %v135, %v138
    %148 = vrot.lane.b32.xlu0 %v33, 127
    %v149 = vpop.permute.xlu0 %148
    %150 = vrot.lane.b32.xlu0 %v34, 127
    %v151 = vpop.permute.xlu0 %150
    %152 = vrot.lane.b32.xlu0 %v35, 127
    %v153 = vpop.permute.xlu0 %152
    %vm154 = vcmask 1039360
    %v155 = vsel %vm154, %v149, %v151
    %v156 = vsel %vm154, %v151, %v153
    %v161 = vsel %vm154, %v153, %v149
    %162 = vrot.lane.b32.xlu0 %v33, 111
    %v163 = vpop.permute.xlu0 %162
    %164 = vrot.lane.b32.xlu0 %v34, 111
    %v165 = vpop.permute.xlu0 %164
    %166 = vrot.lane.b32.xlu0 %v35, 111
    %v167 = vpop.permute.xlu0 %166
    %vm168 = vcmask 908288
    %v169 = vsel %vm168, %v163, %v165
    %v170 = vsel %vm168, %v165, %v167
    %v175 = vsel %vm168, %v167, %v163
    %176 = vrot.lane.b32.xlu0 %v33, 110
    %v177 = vpop.permute.xlu0 %176
    %178 = vrot.lane.b32.xlu0 %v34, 110
    %v179 = vpop.permute.xlu0 %178
    %180 = vrot.lane.b32.xlu0 %v35, 110
    %v181 = vpop.permute.xlu0 %180
    %vm182 = vcmask 900096
    %v183 = vsel %vm182, %v177, %v179
    %v184 = vsel %vm182, %v179, %v181
    %v189 = vsel %vm182, %v181, %v177
    %190 = vrot.lane.b32.xlu0 %v33, 109
    %v191 = vpop.permute.xlu0 %190
    %192 = vrot.lane.b32.xlu0 %v34, 109
    %v193 = vpop.permute.xlu0 %192
    %194 = vrot.lane.b32.xlu0 %v35, 109
    %v195 = vpop.permute.xlu0 %194
    %vm196 = vcmask 891904
    %v197 = vsel %vm196, %v191, %v193
    %v198 = vsel %vm196, %v193, %v195
    %v203 = vsel %vm196, %v195, %v191
    %205 = vset.pattern.permute.xlu0 0
    %206 = vperm.xlu0 %205, %v38
    %v207 = vpop.permute.xlu0 %206
    %vm209 = vcmask 588800
    %v211 = vsel %vm209, %v36, 0
    %213 = vmatprep.subr.mxu0 %v100
    %214 = vmatpush1.msra.mxu0 %v105
    %215 = vmatprep.subr.mxu0 %v114
    %216 = vmatpush1.msra.mxu0 %v119
    %217 = vmatprep.subr.mxu0 %v128
    %218 = vmatpush1.msra.mxu0 %v133
    %219 = vmatprep.subr.mxu0 %v142
    %220 = vmatpush1.msra.mxu0 %v147
    %221 = vmatprep.subr.mxu0 %v34
    %222 = vmatpush1.msra.mxu0 %v33
    %223 = vmatprep.subr.mxu0 %v156
    %224 = vmatpush1.msra.mxu0 %v155
    %225 = vmatprep.subr.mxu0 %v170
    %226 = vmatpush1.msra.mxu0 %v169
    %227 = vmatprep.subr.mxu0 %v184
    %228 = vmatpush1.msra.mxu0 %v183
    %229 = vmatprep.subr.mxu0 %v198
    %230 = vmatpush1.msra.mxu0 %v197
    %231 = vmatprep.subr.mxu0 0.0
    %232 = vmatpush1.msra.mxu0 0.0
    %233 = vmatprep.subr.mxu0 0.0
    %234 = vmatpush1.msra.mxu0 0.0
    %235 = vmatprep.subr.mxu0 0.0
    %236 = vmatpush1.msra.mxu0 0.0
    %237 = vmatprep.subr.mxu0 0.0
    %238 = vmatpush1.msra.mxu0 0.0
    %239 = vmatprep.subr.mxu0 0.0
    %240 = vmatpush1.msra.mxu0 0.0
    %241 = vmatprep.subr.mxu0 0.0
    %242 = vmatpush1.msra.mxu0 0.0
    %243 = vmatprep.subr.mxu0 0.0
    %244 = vmatpush1.msra.mxu0 0.0
    %245 = vmatprep.subr.mxu0 0.0
    %246 = vmatpush1.msra.mxu0 0.0
    %247 = vmatprep.subr.mxu0 0.0
    %248 = vmatpush1.msra.mxu0 0.0
    %249 = vmatprep.subr.mxu0 0.0
    %250 = vmatpush1.msra.mxu0 0.0
    %251 = vmatprep.subr.mxu0 0.0
    %252 = vmatpush1.msra.mxu0 0.0
    %253 = vmatprep.subr.mxu0 0.0
    %254 = vmatpush1.msra.mxu0 0.0
    %255 = vmatprep.subr.mxu0 0.0
    %256 = vmatpush1.msra.mxu0 0.0
    %257 = vmatprep.subr.mxu0 0.0
    %258 = vmatpush1.msra.mxu0 0.0
    %259 = vmatprep.subr.mxu0 0.0
    %260 = vmatpush1.msra.mxu0 0.0
    %261 = vmatprep.subr.mxu0 0.0
    %262 = vmatpush1.msra.mxu0 0.0
    %263 = vmatprep.subr.mxu0 0.0
    %264 = vmatpush1.msra.mxu0 0.0
    %265 = vmatprep.subr.mxu0 0.0
    %266 = vmatpush1.msra.mxu0 0.0
    %267 = vmatprep.subr.mxu0 0.0
    %268 = vmatpush1.msra.mxu0 0.0
    %269 = vmatprep.subr.mxu0 0.0
    %270 = vmatpush1.msra.mxu0 0.0
    %271 = vmatprep.subr.mxu0 0.0
    %272 = vmatpush1.msra.mxu0 0.0
    %273 = vmatprep.subr.mxu0 0.0
    %274 = vmatpush1.msra.mxu0 0.0
    %275 = vmatprep.subr.mxu0 0.0
    %276 = vmatpush1.msra.mxu0 0.0
    %277 = vmatprep.mubr.f32.mxu0 0.0
    %278 = vmatmul.mubr.f32.gmra.mrb[0].mxu0 %v211
    %v279 = vpop.f32.mrb[0].mxu0
    %v280 = vadd.f32 %v207, %v279
    %v281 = vpop.f32.mrb[0].mxu0
    %v282 = vadd.f32 %v207, %v281
    %283 = vdwg.mxu0
    %284 = vmatprep.subr.mxu0 0.0
    %285 = vmatpush1.msra.mxu0 %v101
    %286 = vmatprep.subr.mxu0 0.0
    %287 = vmatpush1.msra.mxu0 %v115
    %288 = vmatprep.subr.mxu0 0.0
    %289 = vmatpush1.msra.mxu0 %v129
    %290 = vmatprep.subr.mxu0 0.0
    %291 = vmatpush1.msra.mxu0 %v143
    %292 = vmatprep.subr.mxu0 0.0
    %293 = vmatpush1.msra.mxu0 %v35
    %294 = vmatprep.subr.mxu0 0.0
    %295 = vmatpush1.msra.mxu0 %v161
    %296 = vmatprep.subr.mxu0 0.0
    %297 = vmatpush1.msra.mxu0 %v175
    %298 = vmatprep.subr.mxu0 0.0
    %299 = vmatpush1.msra.mxu0 %v189
    %300 = vmatprep.subr.mxu0 0.0
    %301 = vmatpush1.msra.mxu0 %v203
    %302 = vmatprep.subr.mxu0 0.0
    %303 = vmatpush1.msra.mxu0 0.0
    %304 = vmatprep.subr.mxu0 0.0
    %305 = vmatpush1.msra.mxu0 0.0
    %306 = vmatprep.subr.mxu0 0.0
    %307 = vmatpush1.msra.mxu0 0.0
    %308 = vmatprep.subr.mxu0 0.0
    %309 = vmatpush1.msra.mxu0 0.0
    %310 = vmatprep.subr.mxu0 0.0
    %311 = vmatpush1.msra.mxu0 0.0
    %312 = vmatprep.subr.mxu0 0.0
    %313 = vmatpush1.msra.mxu0 0.0
    %314 = vmatprep.subr.mxu0 0.0
    %315 = vmatpush1.msra.mxu0 0.0
    %316 = vmatprep.subr.mxu0 0.0
    %317 = vmatpush1.msra.mxu0 0.0
    %318 = vmatprep.subr.mxu0 0.0
    %319 = vmatpush1.msra.mxu0 0.0
    %320 = vmatprep.subr.mxu0 0.0
    %321 = vmatpush1.msra.mxu0 0.0
    %322 = vmatprep.subr.mxu0 0.0
    %323 = vmatpush1.msra.mxu0 0.0
    %324 = vmatprep.subr.mxu0 0.0
    %325 = vmatpush1.msra.mxu0 0.0
    %326 = vmatprep.subr.mxu0 0.0
    %327 = vmatpush1.msra.mxu0 0.0
    %328 = vmatprep.subr.mxu0 0.0
    %329 = vmatpush1.msra.mxu0 0.0
    %330 = vmatprep.subr.mxu0 0.0
    %331 = vmatpush1.msra.mxu0 0.0
    %332 = vmatprep.subr.mxu0 0.0
    %333 = vmatpush1.msra.mxu0 0.0
    %334 = vmatprep.subr.mxu0 0.0
    %335 = vmatpush1.msra.mxu0 0.0
    %336 = vmatprep.subr.mxu0 0.0
    %337 = vmatpush1.msra.mxu0 0.0
    %338 = vmatprep.subr.mxu0 0.0
    %339 = vmatpush1.msra.mxu0 0.0
    %340 = vmatprep.subr.mxu0 0.0
    %341 = vmatpush1.msra.mxu0 0.0
    %342 = vmatprep.subr.mxu0 0.0
    %343 = vmatpush1.msra.mxu0 0.0
    %344 = vmatprep.subr.mxu0 0.0
    %345 = vmatpush1.msra.mxu0 0.0
    %346 = vmatprep.subr.mxu0 0.0
    %347 = vmatpush1.msra.mxu0 0.0
    %348 = vmatprep.mubr.f32.mxu0 0.0
    %349 = vmatmul.mubr.f32.gmra.mrb[0].mxu0 %v211
    %v350 = vpop.f32.mrb[0].mxu0
    %v351 = vadd.f32 %v207, %v350
    %v352 = vpop.f32.mrb[0].mxu0
    %353 = vdwg.mxu0
    %v354 = vmax.f32 %v280, 0.0
    %v355 = vmax.f32 %v282, 0.0
    %v356 = vmax.f32 %v351, 0.0
    %v357 = vmul.f32 %v354, %v86
    %v358 = vmul.f32 %v355, %v87
    %v359 = vmul.f32 %v356, %v88
    %361 = vrot.lane.b32.xlu0 %v359, 19
    %v362 = vpop.permute.xlu0 %361
    %366 = vrot.lane.b32.xlu0 %v357, 19
    %v367 = vpop.permute.xlu0 %366
    %368 = vrot.lane.b32.xlu0 %v358, 19
    %v369 = vpop.permute.xlu0 %368
    %v370 = vsel %vm99, %v367, %v369
    %v371 = vsel %vm99, %v369, %v362
    %v375 = vsel %vm99, %v362, %v367
    %376 = vrot.lane.b32.xlu0 %v359, 18
    %v377 = vpop.permute.xlu0 %376
    %379 = vrot.lane.b32.xlu0 %v357, 18
    %v380 = vpop.permute.xlu0 %379
    %381 = vrot.lane.b32.xlu0 %v358, 18
    %v382 = vpop.permute.xlu0 %381
    %v383 = vsel %vm113, %v380, %v382
    %v384 = vsel %vm113, %v382, %v377
    %v388 = vsel %vm113, %v377, %v380
    %389 = vrot.lane.b32.xlu0 %v359, 17
    %v390 = vpop.permute.xlu0 %389
    %392 = vrot.lane.b32.xlu0 %v357, 17
    %v393 = vpop.permute.xlu0 %392
    %394 = vrot.lane.b32.xlu0 %v358, 17
    %v395 = vpop.permute.xlu0 %394
    %v396 = vsel %vm127, %v393, %v395
    %v397 = vsel %vm127, %v395, %v390
    %v401 = vsel %vm127, %v390, %v393
    %402 = vrot.lane.b32.xlu0 %v359, 1
    %v403 = vpop.permute.xlu0 %402
    %405 = vrot.lane.b32.xlu0 %v357, 1
    %v406 = vpop.permute.xlu0 %405
    %407 = vrot.lane.b32.xlu0 %v358, 1
    %v408 = vpop.permute.xlu0 %407
    %v409 = vsel %vm141, %v406, %v408
    %v410 = vsel %vm141, %v408, %v403
    %v414 = vsel %vm141, %v403, %v406
    %415 = vrot.lane.b32.xlu0 %v357, 127
    %v416 = vpop.permute.xlu0 %415
    %417 = vrot.lane.b32.xlu0 %v358, 127
    %v418 = vpop.permute.xlu0 %417
    %419 = vrot.lane.b32.xlu0 %v359, 127
    %v420 = vpop.permute.xlu0 %419
    %v421 = vsel %vm154, %v416, %v418
    %v422 = vsel %vm154, %v418, %v420
    %v427 = vsel %vm154, %v420, %v416
    %428 = vrot.lane.b32.xlu0 %v357, 111
    %v429 = vpop.permute.xlu0 %428
    %430 = vrot.lane.b32.xlu0 %v358, 111
    %v431 = vpop.permute.xlu0 %430
    %432 = vrot.lane.b32.xlu0 %v359, 111
    %v433 = vpop.permute.xlu0 %432
    %v434 = vsel %vm168, %v429, %v431
    %v435 = vsel %vm168, %v431, %v433
    %v440 = vsel %vm168, %v433, %v429
    %441 = vrot.lane.b32.xlu0 %v357, 110
    %v442 = vpop.permute.xlu0 %441
    %443 = vrot.lane.b32.xlu0 %v358, 110
    %v444 = vpop.permute.xlu0 %443
    %445 = vrot.lane.b32.xlu0 %v359, 110
    %v446 = vpop.permute.xlu0 %445
    %v447 = vsel %vm182, %v442, %v444
    %v448 = vsel %vm182, %v444, %v446
    %v453 = vsel %vm182, %v446, %v442
    %454 = vrot.lane.b32.xlu0 %v357, 109
    %v455 = vpop.permute.xlu0 %454
    %456 = vrot.lane.b32.xlu0 %v358, 109
    %v457 = vpop.permute.xlu0 %456
    %458 = vrot.lane.b32.xlu0 %v359, 109
    %v459 = vpop.permute.xlu0 %458
    %v460 = vsel %vm196, %v455, %v457
    %v461 = vsel %vm196, %v457, %v459
    %v466 = vsel %vm196, %v459, %v455
    %v468 = vsel %vm209, %v37, 0
    %470 = vmatprep.subr.mxu0 %v370
    %471 = vmatpush1.msra.mxu0 %v375
    %472 = vmatprep.subr.mxu0 %v383
    %473 = vmatpush1.msra.mxu0 %v388
    %474 = vmatprep.subr.mxu0 %v396
    %475 = vmatpush1.msra.mxu0 %v401
    %476 = vmatprep.subr.mxu0 %v409
    %477 = vmatpush1.msra.mxu0 %v414
    %478 = vmatprep.subr.mxu0 %v358
    %479 = vmatpush1.msra.mxu0 %v357
    %480 = vmatprep.subr.mxu0 %v422
    %481 = vmatpush1.msra.mxu0 %v421
    %482 = vmatprep.subr.mxu0 %v435
    %483 = vmatpush1.msra.mxu0 %v434
    %484 = vmatprep.subr.mxu0 %v448
    %485 = vmatpush1.msra.mxu0 %v447
    %486 = vmatprep.subr.mxu0 %v461
    %487 = vmatpush1.msra.mxu0 %v460
    %488 = vmatprep.subr.mxu0 0.0
    %489 = vmatpush1.msra.mxu0 0.0
    %490 = vmatprep.subr.mxu0 0.0
    %491 = vmatpush1.msra.mxu0 0.0
    %492 = vmatprep.subr.mxu0 0.0
    %493 = vmatpush1.msra.mxu0 0.0
    %494 = vmatprep.subr.mxu0 0.0
    %495 = vmatpush1.msra.mxu0 0.0
    %496 = vmatprep.subr.mxu0 0.0
    %497 = vmatpush1.msra.mxu0 0.0
    %498 = vmatprep.subr.mxu0 0.0
    %499 = vmatpush1.msra.mxu0 0.0
    %500 = vmatprep.subr.mxu0 0.0
    %501 = vmatpush1.msra.mxu0 0.0
    %502 = vmatprep.subr.mxu0 0.0
    %503 = vmatpush1.msra.mxu0 0.0
    %504 = vmatprep.subr.mxu0 0.0
    %505 = vmatpush1.msra.mxu0 0.0
    %506 = vmatprep.subr.mxu0 0.0
    %507 = vmatpush1.msra.mxu0 0.0
    %508 = vmatprep.subr.mxu0 0.0
    %509 = vmatpush1.msra.mxu0 0.0
    %510 = vmatprep.subr.mxu0 0.0
    %511 = vmatpush1.msra.mxu0 0.0
    %512 = vmatprep.subr.mxu0 0.0
    %513 = vmatpush1.msra.mxu0 0.0
    %514 = vmatprep.subr.mxu0 0.0
    %515 = vmatpush1.msra.mxu0 0.0
    %516 = vmatprep.subr.mxu0 0.0
    %517 = vmatpush1.msra.mxu0 0.0
    %518 = vmatprep.subr.mxu0 0.0
    %519 = vmatpush1.msra.mxu0 0.0
    %520 = vmatprep.subr.mxu0 0.0
    %521 = vmatpush1.msra.mxu0 0.0
    %522 = vmatprep.subr.mxu0 0.0
    %523 = vmatpush1.msra.mxu0 0.0
    %524 = vmatprep.subr.mxu0 0.0
    %525 = vmatpush1.msra.mxu0 0.0
    %526 = vmatprep.subr.mxu0 0.0
    %527 = vmatpush1.msra.mxu0 0.0
    %528 = vmatprep.subr.mxu0 0.0
    %529 = vmatpush1.msra.mxu0 0.0
    %530 = vmatprep.subr.mxu0 0.0
    %531 = vmatpush1.msra.mxu0 0.0
    %532 = vmatprep.subr.mxu0 0.0
    %533 = vmatpush1.msra.mxu0 0.0
    %534 = vmatprep.mubr.f32.mxu0 0.0
    %535 = vmatmul.mubr.f32.gmra.mrb[0].mxu0 %v468
    %v536 = vpop.f32.mrb[0].mxu0
    %v537 = vadd.f32 0.0, %v536
    %v538 = vpop.f32.mrb[0].mxu0
    %v539 = vadd.f32 0.0, %v538
    %540 = vdwg.mxu0
    %541 = vmatprep.subr.mxu0 0.0
    %542 = vmatpush1.msra.mxu0 %v371
    %543 = vmatprep.subr.mxu0 0.0
    %544 = vmatpush1.msra.mxu0 %v384
    %545 = vmatprep.subr.mxu0 0.0
    %546 = vmatpush1.msra.mxu0 %v397
    %547 = vmatprep.subr.mxu0 0.0
    %548 = vmatpush1.msra.mxu0 %v410
    %549 = vmatprep.subr.mxu0 0.0
    %550 = vmatpush1.msra.mxu0 %v359
    %551 = vmatprep.subr.mxu0 0.0
    %552 = vmatpush1.msra.mxu0 %v427
    %553 = vmatprep.subr.mxu0 0.0
    %554 = vmatpush1.msra.mxu0 %v440
    %555 = vmatprep.subr.mxu0 0.0
    %556 = vmatpush1.msra.mxu0 %v453
    %557 = vmatprep.subr.mxu0 0.0
    %558 = vmatpush1.msra.mxu0 %v466
    %559 = vmatprep.subr.mxu0 0.0
    %560 = vmatpush1.msra.mxu0 0.0
    %561 = vmatprep.subr.mxu0 0.0
    %562 = vmatpush1.msra.mxu0 0.0
    %563 = vmatprep.subr.mxu0 0.0
    %564 = vmatpush1.msra.mxu0 0.0
    %565 = vmatprep.subr.mxu0 0.0
    %566 = vmatpush1.msra.mxu0 0.0
    %567 = vmatprep.subr.mxu0 0.0
    %568 = vmatpush1.msra.mxu0 0.0
    %569 = vmatprep.subr.mxu0 0.0
    %570 = vmatpush1.msra.mxu0 0.0
    %571 = vmatprep.subr.mxu0 0.0
    %572 = vmatpush1.msra.mxu0 0.0
    %573 = vmatprep.subr.mxu0 0.0
    %574 = vmatpush1.msra.mxu0 0.0
    %575 = vmatprep.subr.mxu0 0.0
    %576 = vmatpush1.msra.mxu0 0.0
    %577 = vmatprep.subr.mxu0 0.0
    %578 = vmatpush1.msra.mxu0 0.0
    %579 = vmatprep.subr.mxu0 0.0
    %580 = vmatpush1.msra.mxu0 0.0
    %581 = vmatprep.subr.mxu0 0.0
    %582 = vmatpush1.msra.mxu0 0.0
    %583 = vmatprep.subr.mxu0 0.0
    %584 = vmatpush1.msra.mxu0 0.0
    %585 = vmatprep.subr.mxu0 0.0
    %586 = vmatpush1.msra.mxu0 0.0
    %587 = vmatprep.subr.mxu0 0.0
    %588 = vmatpush1.msra.mxu0 0.0
    %589 = vmatprep.subr.mxu0 0.0
    %590 = vmatpush1.msra.mxu0 0.0
    %591 = vmatprep.subr.mxu0 0.0
    %592 = vmatpush1.msra.mxu0 0.0
    %593 = vmatprep.subr.mxu0 0.0
    %594 = vmatpush1.msra.mxu0 0.0
    %595 = vmatprep.subr.mxu0 0.0
    %596 = vmatpush1.msra.mxu0 0.0
    %597 = vmatprep.subr.mxu0 0.0
    %598 = vmatpush1.msra.mxu0 0.0
    %599 = vmatprep.subr.mxu0 0.0
    %600 = vmatpush1.msra.mxu0 0.0
    %601 = vmatprep.subr.mxu0 0.0
    %602 = vmatpush1.msra.mxu0 0.0
    %603 = vmatprep.subr.mxu0 0.0
    %604 = vmatpush1.msra.mxu0 0.0
    %605 = vmatprep.mubr.f32.mxu0 0.0
    %606 = vmatmul.mubr.f32.gmra.mrb[0].mxu0 %v468
    %v607 = vpop.f32.mrb[0].mxu0
    %v608 = vadd.f32 0.0, %v607
    %v609 = vpop.f32.mrb[0].mxu0
    %610 = vdwg.mxu0
    %v611 = vadd.f32 %v33, %v537
    %v612 = vadd.f32 %v34, %v539
    %v613 = vadd.f32 %v35, %v608
    %615 = vset.pattern.permute.xlu0 0
    %616 = vperm.xlu0 %615, %v39
    %v617 = vpop.permute.xlu0 %616
    %v619 = vadd.f32 %v611, %v617
    %v620 = vadd.f32 %v612, %v617
    %v621 = vadd.f32 %v613, %v617
    %v622 = vmax.f32 %v619, 0.0
    %v623 = vmax.f32 %v620, 0.0
    %v624 = vmax.f32 %v621, 0.0
    %625 = vst [vmem:[#allocation5] sm:$0xff] %v622
    %626 = vst [vmem:[#allocation5 + $0x8] sm:$0xff] %v623
    %627 = vst [vmem:[#allocation5 + $0x10] sm:$0xff] %v624
    // Predicated region
    $region26: #{tpu_custom_call.1} parent=1 // pred_check
      _
    $region27: #{tpu_custom_call.1} parent=1 // pred_check_branch
      %629 = sbr.rel (0) target = $region29
    $region28: #{tpu_custom_call.1} parent=1 // pred_region
      %s631 = ssub.s32 384, 384
      %632 = vsyncadd [#allocation4], %s631
      %s634 = sshll.u32 [#allocation5], 4
      %s635 = int_to_ptr.vmem [resolvable:$true] %s634
      %637 = dma.vmem_to_hbm [thread:$0]  %s635, 384, %s5, [#allocation4]
    $region29: #{tpu_custom_call.1} parent=1 // pred_fallthru
      _
    // Predicated region
    $region30: #{tpu_custom_call.1} parent=1 // pred_check
      _
    $region31: #{tpu_custom_call.1} parent=1 // pred_check_branch
      %639 = sbr.rel (0) target = $region33
    $region32: #{tpu_custom_call.1} parent=1 // pred_region
      %640 = dma.done [#allocation4], 384
    $region33: #{tpu_custom_call.1} parent=1 // pred_fallthru
      _
    %641 = vsyncpa [#allocation3], 1
    %642 = vsyncpa [#allocation4], 1

</llo_original>
